<compile_context>
chip_gen: v5e
topology: v5e:2x2
jax: 0.10.0
libtpu: 0.0.40
codegen_flags: <defaults>
</compile_context>

<pallas_src>
import math
import functools

import jax
import jax.numpy as jnp
from jax import lax
from jax.experimental import pallas as pl
from jax.experimental.pallas import tpu as pltpu


def _attention_kernel(*refs, scale, masked):
    if masked:
        q_ref, k_ref, v_ref, mask_ref, o_ref, score_ref = refs
    else:
        q_ref, k_ref, v_ref, o_ref, score_ref = refs
        mask_ref = None

    # Blocks: q (Gh, Tq, D); k, v (Gh, S, D); mask (1 or Gh, Tq, S) int8.
    q = q_ref[...]
    k = k_ref[...]
    v = v_ref[...]

    # Fold 1/sqrt(d_k) into Q: O(Tq*D) instead of a VPU pass over the S x S scores.
    q = (q.astype(jnp.float32) * jnp.float32(scale)).astype(q.dtype)

    # scores = Q @ K^T, batched over heads; contraction over D without an
    # explicit K transpose (feeds the MXU directly, f32 accumulation).
    scores = lax.dot_general(
        q, k, (((2,), (2,)), ((0,), (0,))),
        preferred_element_type=jnp.float32)            # (Gh, Tq, S) f32

    if mask_ref is not None:
        m = mask_ref[...]                               # int8, broadcasts over Gh
        scores = jnp.where(m == 0, jnp.float32(-1.0e9), scores)

    # Numerically stable softmax over keys (f32 math).
    mx = jnp.max(scores, axis=-1, keepdims=True)
    e = jnp.exp(scores - mx)
    denom = jnp.sum(e, axis=-1, keepdims=True)
    # Exact reciprocal touches only Gh*Tq scalars (then one VPU multiply), so it
    # is essentially free and keeps the returned probabilities accurate.
    p = e * pl.reciprocal(denom, approx=False)

    score_ref[...] = p.astype(score_ref.dtype)

    # output = P @ V, batched over heads; P cast to V's dtype so bf16 models run
    # the second matmul at the bf16 MXU issue rate.
    out = lax.dot_general(
        p.astype(v.dtype), v, (((2,), (1,)), ((0,), (0,))),
        preferred_element_type=jnp.float32)             # (Gh, Tq, D)
    o_ref[...] = out.astype(o_ref.dtype)


def _choose_tiles(BH, S, D, itemsize):
    """Pick (heads_per_step, query_tile) bounding the per-step VMEM working set."""
    budget = 4 * 1024 * 1024  # bytes/grid step; fits default scoped VMEM double-buffered

    def per_step(gh, tq):
        return gh * (tq * S * 4                 # f32 score / softmax temporaries
                     + tq * S * itemsize        # score output tile
                     + tq * S                   # int8 mask tile (upper bound)
                     + 2 * S * D * itemsize     # K and V tiles (full sequence)
                     + 2 * tq * D * itemsize)   # Q and O tiles

    # Query tile: the largest divisor of S (S itself, or a multiple of 8) that fits.
    candidates = [S] + [t for t in (1024, 512, 256, 128, 64, 32, 16, 8)
                        if t < S and S % t == 0]
    tq = candidates[-1]
    for t in candidates:
        if per_step(1, t) <= budget:
            tq = t
            break

    # Heads per step: batch tiny heads so each grid step feeds the MXU enough work.
    gh = max(1, min(BH, budget // max(per_step(1, tq), 1)))
    while BH % gh:
        gh -= 1
    return gh, tq


def _pallas_sdpa(q, k, v, mask, shared_mask):
    BH, S, D = q.shape
    gh, tq = _choose_tiles(BH, S, D, q.dtype.itemsize)
    grid = (BH // gh, S // tq)

    q_spec = pl.BlockSpec((gh, tq, D), lambda g, qi: (g, qi, 0))
    kv_spec = pl.BlockSpec((gh, S, D), lambda g, qi: (g, 0, 0))   # constant over qi: DMA'd once per head-group
    s_spec = pl.BlockSpec((gh, tq, S), lambda g, qi: (g, qi, 0))

    in_specs = [q_spec, kv_spec, kv_spec]
    operands = [q, k, v]
    masked = mask is not None
    if masked:
        if shared_mask:
            in_specs.append(pl.BlockSpec((1, tq, S), lambda g, qi: (0, qi, 0)))
        else:
            in_specs.append(pl.BlockSpec((gh, tq, S), lambda g, qi: (g, qi, 0)))
        operands.append(mask)

    kernel = functools.partial(
        _attention_kernel, scale=1.0 / math.sqrt(D), masked=masked)

    return pl.pallas_call(
        kernel,
        out_shape=(
            jax.ShapeDtypeStruct((BH, S, D), q.dtype),
            jax.ShapeDtypeStruct((BH, S, S), q.dtype),
        ),
        grid_spec=pltpu.PrefetchScalarGridSpec(
            num_scalar_prefetch=0,
            grid=grid,
            in_specs=in_specs,
            out_specs=(q_spec, s_spec),
        ),
        compiler_params=pltpu.CompilerParams(
            dimension_semantics=("parallel", "parallel"),
        ),
    )(*operands)


@jax.jit
def _sdpa_nomask(q, k, v):
    return _pallas_sdpa(q, k, v, None, False)


@functools.partial(jax.jit, static_argnames=("shared_mask",))
def _sdpa_masked(q, k, v, mask, shared_mask):
    return _pallas_sdpa(q, k, v, mask, shared_mask)


def scaled_dot_product_attention(Q, K, V, mask=None):
    """Matches ScaledDotProductAttention.forward: returns (score @ V, score)."""
    B, H, S, D = Q.shape
    BH = B * H
    q = Q.reshape(BH, S, D)
    k = K.reshape(BH, S, D)
    v = V.reshape(BH, S, D)

    if mask is None:
        out, score = _sdpa_nomask(q, k, v)
    else:
        m = jnp.asarray(mask)
        while m.ndim < 4:
            m = m[None]
        if m.shape[0] == 1 and m.shape[1] == 1:
            # Mask shared across batch & heads: one (1, S, S) int8 copy, constant index_map.
            m = jnp.broadcast_to(m, (1, 1, S, S)).reshape(1, S, S)
            shared = True
        else:
            m = jnp.broadcast_to(m, (B, H, S, S)).reshape(BH, S, S)
            shared = False
        m = (m != 0).astype(jnp.int8)
        out, score = _sdpa_masked(q, k, v, m, shared)

    # TODO(synk): for D < 128 the per-head output store is a masked partial store;
    # a (B, S, H*D) output layout would be lane-dense but changes the module's layout.
    return out.reshape(B, H, S, D), score.reshape(B, H, S, S)


def _reference(Q, K, V, mask=None):
    d_k = K.shape[-1]
    score = jnp.einsum("bhqd,bhkd->bhqk", Q.astype(jnp.float32),
                       K.astype(jnp.float32)) / math.sqrt(d_k)
    if mask is not None:
        score = jnp.where(mask == 0, -1.0e9, score)
    score = jax.nn.softmax(score, axis=-1)
    out = jnp.einsum("bhqk,bhkd->bhqd", score, V.astype(jnp.float32))
    return out, score


if __name__ == "__main__":
    key = jax.random.PRNGKey(0)
    kq, kk, kv, km = jax.random.split(key, 4)

    B, H, S, D = 2, 2, 8, 32
    Q = jax.random.normal(kq, (B, H, S, D), dtype=jnp.float32)
    K = jax.random.normal(kk, (B, H, S, D), dtype=jnp.float32)
    V = jax.random.normal(kv, (B, H, S, D), dtype=jnp.float32)
    # Mask broadcast over (B, H), as torch masked_fill allows.
    mask = (jax.random.uniform(km, (1, 1, S, S)) > 0.2).astype(jnp.int32)
    # Per-batch mask (broadcast over heads only) to exercise the non-shared path.
    mask_b = (jax.random.uniform(km, (B, 1, S, S)) > 0.2).astype(jnp.int32)

    # No-mask path.
    out0, score0 = scaled_dot_product_attention(Q, K, V)
    out0, score0 = jax.block_until_ready(out0), jax.block_until_ready(score0)
    ref_out0, ref_score0 = _reference(Q, K, V)
    assert jnp.allclose(out0, ref_out0, atol=1e-4, rtol=1e-4)
    assert jnp.allclose(score0, ref_score0, atol=1e-5, rtol=1e-4)

    # Shared (1,1,S,S) mask path.
    out1, score1 = scaled_dot_product_attention(Q, K, V, mask)
    out1, score1 = jax.block_until_ready(out1), jax.block_until_ready(score1)
    ref_out1, ref_score1 = _reference(Q, K, V, mask)
    assert jnp.allclose(out1, ref_out1, atol=1e-4, rtol=1e-4)
    assert jnp.allclose(score1, ref_score1, atol=1e-5, rtol=1e-4)

    # Per-batch mask path.
    out2, score2 = scaled_dot_product_attention(Q, K, V, mask_b)
    out2, score2 = jax.block_until_ready(out2), jax.block_until_ready(score2)
    ref_out2, ref_score2 = _reference(Q, K, V, mask_b)
    assert jnp.allclose(out2, ref_out2, atol=1e-4, rtol=1e-4)
    assert jnp.allclose(score2, ref_score2, atol=1e-5, rtol=1e-4)

    print("KERNEL_OK")
</pallas_src>

<mosaic_0001>
module attributes {stable_mosaic.version = 11 : i64} {
  func.func @_attention_kernel(%arg0: i32, %arg1: i32, %arg2: memref<4x8x32xf32, #tpu.memory_space<vmem>>, %arg3: memref<4x8x32xf32, #tpu.memory_space<vmem>>, %arg4: memref<4x8x32xf32, #tpu.memory_space<vmem>>, %arg5: memref<4x8x32xf32, #tpu.memory_space<vmem>>, %arg6: memref<4x8x8xf32, #tpu.memory_space<vmem>>) attributes {dimension_semantics = [#tpu.dimension_semantics<parallel>, #tpu.dimension_semantics<parallel>], iteration_bounds = array<i64: 1, 1>, scalar_prefetch = 0 : i64, scratch_operands = 0 : i64, tpu.core_type = #tpu.core_type<tc>, window_params = [{transform_indices = @transform_0, window_bounds = array<i64: 4, 8, 32>}, {transform_indices = @transform_1, window_bounds = array<i64: 4, 8, 32>}, {transform_indices = @transform_2, window_bounds = array<i64: 4, 8, 32>}, {transform_indices = @transform_3, window_bounds = array<i64: 4, 8, 32>}, {transform_indices = @transform_4, window_bounds = array<i64: 4, 8, 8>}]} {
    %c0 = arith.constant 0 : index
    %c0_0 = arith.constant 0 : index
    %c0_1 = arith.constant 0 : index
    %0 = vector.load %arg2[%c0, %c0_0, %c0_1] : memref<4x8x32xf32, #tpu.memory_space<vmem>>, vector<4x8x32xf32>
    %c0_2 = arith.constant 0 : index
    %c0_3 = arith.constant 0 : index
    %c0_4 = arith.constant 0 : index
    %1 = vector.load %arg3[%c0_2, %c0_3, %c0_4] : memref<4x8x32xf32, #tpu.memory_space<vmem>>, vector<4x8x32xf32>
    %c0_5 = arith.constant 0 : index
    %c0_6 = arith.constant 0 : index
    %c0_7 = arith.constant 0 : index
    %2 = vector.load %arg4[%c0_5, %c0_6, %c0_7] : memref<4x8x32xf32, #tpu.memory_space<vmem>>, vector<4x8x32xf32>
    %cst = arith.constant 0.176776692 : f32
    %3 = vector.broadcast %cst : f32 to vector<4x8x32xf32>
    %4 = arith.mulf %0, %3 : vector<4x8x32xf32>
    %cst_8 = arith.constant dense<0.000000e+00> : vector<4x8x8xf32>
    %5 = tpu.matmul %4, %1, %cst_8 {dimension_numbers = #tpu.dot_dimension_numbers<[2], [2], [1], [1], [0, 0, 0, 1, 1, 1], [0], [0]>} : vector<4x8x32xf32>, vector<4x8x32xf32>, vector<4x8x8xf32> -> vector<4x8x8xf32>
    %cst_9 = arith.constant dense<0xFF800000> : vector<4x8xf32>
    %6 = vector.multi_reduction <maximumf>, %5, %cst_9 [2] : vector<4x8x8xf32> to vector<4x8xf32>
    %7 = vector.shape_cast %6 : vector<4x8xf32> to vector<4x8x1xf32>
    %8 = vector.broadcast %7 : vector<4x8x1xf32> to vector<4x8x8xf32>
    %9 = arith.subf %5, %8 : vector<4x8x8xf32>
    %10 = math.exp %9 : vector<4x8x8xf32>
    %cst_10 = arith.constant dense<0.000000e+00> : vector<4x8xf32>
    %11 = vector.multi_reduction <add>, %10, %cst_10 [2] : vector<4x8x8xf32> to vector<4x8xf32>
    %12 = vector.shape_cast %11 : vector<4x8xf32> to vector<4x8x1xf32>
    %13 = tpu.reciprocal %12 : vector<4x8x1xf32> -> vector<4x8x1xf32>
    %14 = vector.broadcast %13 : vector<4x8x1xf32> to vector<4x8x8xf32>
    %15 = arith.mulf %10, %14 : vector<4x8x8xf32>
    %c0_11 = arith.constant 0 : index
    %c0_12 = arith.constant 0 : index
    %c0_13 = arith.constant 0 : index
    %16 = vector.load %arg6[%c0_11, %c0_12, %c0_13] : memref<4x8x8xf32, #tpu.memory_space<vmem>>, vector<4x8x8xf32>
    tpu.vector_store %arg6[%c0_11, %c0_12, %c0_13], %15 {strides = array<i32>} : memref<4x8x8xf32, #tpu.memory_space<vmem>>, vector<4x8x8xf32>,
    %cst_14 = arith.constant dense<0.000000e+00> : vector<4x8x32xf32>
    %17 = tpu.matmul %15, %2, %cst_14 {dimension_numbers = #tpu.dot_dimension_numbers<[2], [1], [1], [2], [0, 0, 0, 1, 1, 2], [0], [0]>} : vector<4x8x8xf32>, vector<4x8x32xf32>, vector<4x8x32xf32> -> vector<4x8x32xf32>
    %c0_15 = arith.constant 0 : index
    %c0_16 = arith.constant 0 : index
    %c0_17 = arith.constant 0 : index
    %18 = vector.load %arg5[%c0_15, %c0_16, %c0_17] : memref<4x8x32xf32, #tpu.memory_space<vmem>>, vector<4x8x32xf32>
    tpu.vector_store %arg5[%c0_15, %c0_16, %c0_17], %17 {strides = array<i32>} : memref<4x8x32xf32, #tpu.memory_space<vmem>>, vector<4x8x32xf32>,
    return
  }
  func.func @transform_0(%arg0: i32, %arg1: i32) -> (i32, i32, i32) {
    %c0_i32 = arith.constant 0 : i32
    %c0_i32_0 = arith.constant 0 : i32
    return %arg0, %arg1, %c0_i32 : i32, i32, i32
  }
  func.func @transform_1(%arg0: i32, %arg1: i32) -> (i32, i32, i32) {
    %c0_i32 = arith.constant 0 : i32
    %c0_i32_0 = arith.constant 0 : i32
    %c0_i32_1 = arith.constant 0 : i32
    return %arg0, %c0_i32, %c0_i32_0 : i32, i32, i32
  }
  func.func @transform_2(%arg0: i32, %arg1: i32) -> (i32, i32, i32) {
    %c0_i32 = arith.constant 0 : i32
    %c0_i32_0 = arith.constant 0 : i32
    %c0_i32_1 = arith.constant 0 : i32
    return %arg0, %c0_i32, %c0_i32_0 : i32, i32, i32
  }
  func.func @transform_3(%arg0: i32, %arg1: i32) -> (i32, i32, i32) {
    %c0_i32 = arith.constant 0 : i32
    %c0_i32_0 = arith.constant 0 : i32
    return %arg0, %arg1, %c0_i32 : i32, i32, i32
  }
  func.func @transform_4(%arg0: i32, %arg1: i32) -> (i32, i32, i32) {
    %c0_i32 = arith.constant 0 : i32
    %c0_i32_0 = arith.constant 0 : i32
    return %arg0, %arg1, %c0_i32 : i32, i32, i32
  }
}

</mosaic_0001>

<llo_original>
// kernel: _sdpa_nomask.1
$region0: #{_sdpa_nomask.1}
  #allocation0 [shape = 'u32[]', space=smem, size = 0x4, offset = 0x4, fixed_abs, tag = 'smem constant byte address 0x4 - core index']
  #allocation1 [shape = 'u32[72,128]{1,0:T(1,128)}', space=vmem, size = 0x9000, scoped, tag = 'internal scratch']
  %s0 = inlined_call_operand.hbm [shape: f32[4,8,32], index: 0, kind: input, shape index: {}]
  %s1 = inlined_call_operand.hbm [shape: f32[4,8,32], index: 1, kind: input, shape index: {}]
  %s2 = inlined_call_operand.hbm [shape: f32[4,8,32], index: 2, kind: input, shape index: {}]
  %s3 = inlined_call_operand.hbm [shape: f32[4,8,32], index: 3, kind: output, shape index: {0}]
  %s4 = inlined_call_operand.hbm [shape: f32[4,8,8], index: 4, kind: output, shape index: {1}]
  %5 = xla_tuple %s3, %s4
  %s6 = sld [smem:[#allocation0]]
  $region42: #{_sdpa_nomask.1} parent=0
    _
  %s8 = ssub.s32 1, %s6
  %s9 = scalar_select 0, %s8, %s6
  $region1: #{_sdpa_nomask.1} parent=0
    #allocation2 [shape = 'u8[16384]{0}', space=vmem, size = 0x4000, scoped, tag = 'input window, operand 0, single buffered']
    #allocation3 [shape = 's32[1]{0}', space=sflag, size = 0x4, scoped, tag = 'scoped memory for _sdpa_nomask.1']
    #allocation4 [shape = 's32[1]{0}', space=sflag, size = 0x4, scoped, tag = 'scoped memory for _sdpa_nomask.1']
    #allocation5 [shape = 'u8[16384]{0}', space=vmem, size = 0x4000, scoped, tag = 'input window, operand 1, single buffered']
    #allocation6 [shape = 's32[1]{0}', space=sflag, size = 0x4, scoped, tag = 'scoped memory for _sdpa_nomask.1']
    #allocation7 [shape = 'u8[16384]{0}', space=vmem, size = 0x4000, scoped, tag = 'input window, operand 2, single buffered']
    #allocation8 [shape = 'u8[16384]{0}', space=vmem, size = 0x4000, scoped, tag = 'output window, operand 0, single buffered']
    #allocation9 [shape = 'u8[16384]{0}', space=vmem, size = 0x4000, scoped, tag = 'output window, operand 1, single buffered']
    #allocation10 [shape = 's32[1]{0}', space=sflag, size = 0x4, scoped, tag = 'scoped memory for _sdpa_nomask.1']
    %10 = vsyncpa [#allocation3], 0
    %11 = vsyncpa [#allocation6], 0
    %12 = vsyncpa [#allocation4], 0
    %13 = vsyncpa [#allocation10], 0
    // Predicated region
    $region2: #{_sdpa_nomask.1} parent=1 // pred_check
      _
    $region3: #{_sdpa_nomask.1} parent=1 // pred_check_branch
      %15 = sbr.rel (0) target = $region5
    $region4: #{_sdpa_nomask.1} parent=1 // pred_region
      %17 = vsyncadd [#allocation3], 0
      %s18 = sshll.u32 %s0, 4
      %s19 = int_to_ptr.hbm [resolvable:$true] %s18
      %s20 = sshll.u32 [#allocation2], 4
      %s21 = int_to_ptr.vmem [resolvable:$true] %s20
      %26 = dma.hbm_to_vmem [thread:$0]  %s19, 512, %s21, [#allocation3], 128, 128, 8
    $region5: #{_sdpa_nomask.1} parent=1 // pred_fallthru
      _
    // Predicated region
    $region6: #{_sdpa_nomask.1} parent=1 // pred_check
      _
    $region7: #{_sdpa_nomask.1} parent=1 // pred_check_branch
      %28 = sbr.rel (0) target = $region9
    $region8: #{_sdpa_nomask.1} parent=1 // pred_region
      %30 = vsyncadd [#allocation6], 0
      %s31 = sshll.u32 %s1, 4
      %s32 = int_to_ptr.hbm [resolvable:$true] %s31
      %s33 = sshll.u32 [#allocation5], 4
      %s34 = int_to_ptr.vmem [resolvable:$true] %s33
      %39 = dma.hbm_to_vmem [thread:$0]  %s32, 512, %s34, [#allocation6], 128, 128, 8
    $region9: #{_sdpa_nomask.1} parent=1 // pred_fallthru
      _
    // Predicated region
    $region10: #{_sdpa_nomask.1} parent=1 // pred_check
      _
    $region11: #{_sdpa_nomask.1} parent=1 // pred_check_branch
      %41 = sbr.rel (0) target = $region13
    $region12: #{_sdpa_nomask.1} parent=1 // pred_region
      %43 = vsyncadd [#allocation6], 0
      %s44 = sshll.u32 %s2, 4
      %s45 = int_to_ptr.hbm [resolvable:$true] %s44
      %s46 = sshll.u32 [#allocation7], 4
      %s47 = int_to_ptr.vmem [resolvable:$true] %s46
      %52 = dma.hbm_to_vmem [thread:$0]  %s45, 512, %s47, [#allocation6], 128, 128, 8
    $region13: #{_sdpa_nomask.1} parent=1 // pred_fallthru
      _
    // Predicated region
    $region14: #{_sdpa_nomask.1} parent=1 // pred_check
      _
    $region15: #{_sdpa_nomask.1} parent=1 // pred_check_branch
      %54 = sbr.rel (0) target = $region17
    $region16: #{_sdpa_nomask.1} parent=1 // pred_region
      %56 = dma.done [#allocation3], 512
    $region17: #{_sdpa_nomask.1} parent=1 // pred_fallthru
      _
    // Predicated region
    $region18: #{_sdpa_nomask.1} parent=1 // pred_check
      _
    $region19: #{_sdpa_nomask.1} parent=1 // pred_check_branch
      %58 = sbr.rel (0) target = $region21
    $region20: #{_sdpa_nomask.1} parent=1 // pred_region
      %60 = dma.done [#allocation6], 512
    $region21: #{_sdpa_nomask.1} parent=1 // pred_fallthru
      _
    // Predicated region
    $region22: #{_sdpa_nomask.1} parent=1 // pred_check
      _
    $region23: #{_sdpa_nomask.1} parent=1 // pred_check_branch
      %62 = sbr.rel (0) target = $region25
    $region24: #{_sdpa_nomask.1} parent=1 // pred_region
      %64 = dma.done [#allocation6], 512
    $region25: #{_sdpa_nomask.1} parent=1 // pred_fallthru
      _
    %v65 = vld [vmem:[#allocation2] sm:$0xff]
    %v66 = vld [vmem:[#allocation2 + $0x8] sm:$0xff]
    %v67 = vld [vmem:[#allocation2 + $0x10] sm:$0xff]
    %v68 = vld [vmem:[#allocation2 + $0x18] sm:$0xff]
    %v69 = vld [vmem:[#allocation5] sm:$0xff]
    %v70 = vld [vmem:[#allocation5 + $0x8] sm:$0xff]
    %v71 = vld [vmem:[#allocation5 + $0x10] sm:$0xff]
    %v72 = vld [vmem:[#allocation5 + $0x18] sm:$0xff]
    %v73 = vld [vmem:[#allocation7] sm:$0xff]
    %v74 = vld [vmem:[#allocation7 + $0x8] sm:$0xff]
    %v75 = vld [vmem:[#allocation7 + $0x10] sm:$0xff]
    %v76 = vld [vmem:[#allocation7 + $0x18] sm:$0xff]
    %v77 = vmul.f32 %v65, 0.17677669
    %v78 = vmul.f32 %v66, 0.17677669
    %v79 = vmul.f32 %v67, 0.17677669
    %v80 = vmul.f32 %v68, 0.17677669
    %vm81 = vcmask 261120
    %v83 = vsel %vm81, %v77, 0
    %v86 = vsel %vm81, %v69, 0
    %88 = vmatpush.xpose.msra.mxu0 0.0
    %89 = vmatpush.xpose.msra.mxu0 0.0
    %90 = vmatpush.xpose.msra.mxu0 0.0
    %91 = vmatpush.xpose.msra.mxu0 0.0
    %92 = vmatpush.xpose.msra.mxu0 0.0
    %93 = vmatpush.xpose.msra.mxu0 0.0
    %94 = vmatpush.xpose.msra.mxu0 0.0
    %95 = vmatpush.xpose.msra.mxu0 0.0
    %96 = vmatpush.xpose.msra.mxu0 0.0
    %97 = vmatpush.xpose.msra.mxu0 0.0
    %98 = vmatpush.xpose.msra.mxu0 0.0
    %99 = vmatpush.xpose.msra.mxu0 0.0
    %100 = vmatpush.xpose.msra.mxu0 0.0
    %101 = vmatpush.xpose.msra.mxu0 0.0
    %102 = vmatpush.xpose.msra.mxu0 0.0
    %103 = vmatpush.xpose.msra.mxu0 %v86
    %104 = vmatmul.f32.gmra.mxu0 %v83
    %v105 = vpop.f32.mrf.mxu0
    %v106 = vadd.f32 0.0, %v105
    %107 = vdwg.mxu0
    %v109 = vsel %vm81, %v78, 0
    %v112 = vsel %vm81, %v70, 0
    %114 = vmatpush.xpose.msra.mxu0 0.0
    %115 = vmatpush.xpose.msra.mxu0 0.0
    %116 = vmatpush.xpose.msra.mxu0 0.0
    %117 = vmatpush.xpose.msra.mxu0 0.0
    %118 = vmatpush.xpose.msra.mxu0 0.0
    %119 = vmatpush.xpose.msra.mxu0 0.0
    %120 = vmatpush.xpose.msra.mxu0 0.0
    %121 = vmatpush.xpose.msra.mxu0 0.0
    %122 = vmatpush.xpose.msra.mxu0 0.0
    %123 = vmatpush.xpose.msra.mxu0 0.0
    %124 = vmatpush.xpose.msra.mxu0 0.0
    %125 = vmatpush.xpose.msra.mxu0 0.0
    %126 = vmatpush.xpose.msra.mxu0 0.0
    %127 = vmatpush.xpose.msra.mxu0 0.0
    %128 = vmatpush.xpose.msra.mxu0 0.0
    %129 = vmatpush.xpose.msra.mxu0 %v112
    %130 = vmatmul.f32.gmra.mxu0 %v109
    %v131 = vpop.f32.mrf.mxu0
    %v132 = vadd.f32 0.0, %v131
    %133 = vdwg.mxu0
    %v135 = vsel %vm81, %v79, 0
    %v138 = vsel %vm81, %v71, 0
    %140 = vmatpush.xpose.msra.mxu0 0.0
    %141 = vmatpush.xpose.msra.mxu0 0.0
    %142 = vmatpush.xpose.msra.mxu0 0.0
    %143 = vmatpush.xpose.msra.mxu0 0.0
    %144 = vmatpush.xpose.msra.mxu0 0.0
    %145 = vmatpush.xpose.msra.mxu0 0.0
    %146 = vmatpush.xpose.msra.mxu0 0.0
    %147 = vmatpush.xpose.msra.mxu0 0.0
    %148 = vmatpush.xpose.msra.mxu0 0.0
    %149 = vmatpush.xpose.msra.mxu0 0.0
    %150 = vmatpush.xpose.msra.mxu0 0.0
    %151 = vmatpush.xpose.msra.mxu0 0.0
    %152 = vmatpush.xpose.msra.mxu0 0.0
    %153 = vmatpush.xpose.msra.mxu0 0.0
    %154 = vmatpush.xpose.msra.mxu0 0.0
    %155 = vmatpush.xpose.msra.mxu0 %v138
    %156 = vmatmul.f32.gmra.mxu0 %v135
    %v157 = vpop.f32.mrf.mxu0
    %v158 = vadd.f32 0.0, %v157
    %159 = vdwg.mxu0
    %v161 = vsel %vm81, %v80, 0
    %v164 = vsel %vm81, %v72, 0
    %166 = vmatpush.xpose.msra.mxu0 0.0
    %167 = vmatpush.xpose.msra.mxu0 0.0
    %168 = vmatpush.xpose.msra.mxu0 0.0
    %169 = vmatpush.xpose.msra.mxu0 0.0
    %170 = vmatpush.xpose.msra.mxu0 0.0
    %171 = vmatpush.xpose.msra.mxu0 0.0
    %172 = vmatpush.xpose.msra.mxu0 0.0
    %173 = vmatpush.xpose.msra.mxu0 0.0
    %174 = vmatpush.xpose.msra.mxu0 0.0
    %175 = vmatpush.xpose.msra.mxu0 0.0
    %176 = vmatpush.xpose.msra.mxu0 0.0
    %177 = vmatpush.xpose.msra.mxu0 0.0
    %178 = vmatpush.xpose.msra.mxu0 0.0
    %179 = vmatpush.xpose.msra.mxu0 0.0
    %180 = vmatpush.xpose.msra.mxu0 0.0
    %181 = vmatpush.xpose.msra.mxu0 %v164
    %182 = vmatmul.f32.gmra.mxu0 %v161
    %v183 = vpop.f32.mrf.mxu0
    %v184 = vadd.f32 0.0, %v183
    %185 = vdwg.mxu0
    %vm186 = vcmask 64512
    %v187 = vsel %vm186, %v106, -inf
    %188 = vmax.xlane.f32.xlu0 %v187
    %v189 = vpop.xlane.xlu0 %188
    %v190 = vsel %vm186, %v132, -inf
    %191 = vmax.xlane.f32.xlu0 %v190
    %v192 = vpop.xlane.xlu0 %191
    %v193 = vsel %vm186, %v158, -inf
    %194 = vmax.xlane.f32.xlu0 %v193
    %v195 = vpop.xlane.xlu0 %194
    %v196 = vsel %vm186, %v184, -inf
    %197 = vmax.xlane.f32.xlu0 %v196
    %v198 = vpop.xlane.xlu0 %197
    %v199 = vsub.f32 %v106, %v189
    %v200 = vsub.f32 %v132, %v192
    %v201 = vsub.f32 %v158, %v195
    %v202 = vsub.f32 %v184, %v198
    %v203 = vmul.f32 %v199, 1.442695
    %v204 = vpow.pop %v203
    %v205 = vmul.f32 %v200, 1.442695
    %v206 = vpow.pop %v205
    %v207 = vmul.f32 %v201, 1.442695
    %v208 = vpow.pop %v207
    %v209 = vmul.f32 %v202, 1.442695
    %v210 = vpow.pop %v209
    %v211 = vsel %vm186, %v204, 0.0
    %212 = vadd.xlane.f32.xlu0 %v211
    %v213 = vpop.xlane.xlu0 %212
    %v214 = vsel %vm186, %v206, 0.0
    %215 = vadd.xlane.f32.xlu0 %v214
    %v216 = vpop.xlane.xlu0 %215
    %v217 = vsel %vm186, %v208, 0.0
    %218 = vadd.xlane.f32.xlu0 %v217
    %v219 = vpop.xlane.xlu0 %218
    %v220 = vsel %vm186, %v210, 0.0
    %221 = vadd.xlane.f32.xlu0 %v220
    %v222 = vpop.xlane.xlu0 %221
    %v223 = vrcp.pop %v213
    %v224 = vmul.f32 %v213, %v223
    %v225 = vsub.f32 1.0, %v224
    %v226 = vmul.f32 %v223, %v225
    %v227 = vadd.f32 %v223, %v226
    %vm228 = vweird.f32 %v213
    %vm229 = vweird.f32 %v223
    %vm230 = vmor %vm228, %vm229
    %v231 = vsel %vm230, %v223, %v227
    %v232 = vand.u32 2147483647, %v213
    %vm233 = vcmp.eq.f32.partialorder %v232, 8.507059e+37
    %v234 = vand.u32 %v213, 2147483648
    %v235 = vor.u32 1.1754944e-38, %v234
    %v236 = vsel %vm233, %v235, %v231
    %v237 = vrcp.pop %v216
    %v238 = vmul.f32 %v216, %v237
    %v239 = vsub.f32 1.0, %v238
    %v240 = vmul.f32 %v237, %v239
    %v241 = vadd.f32 %v237, %v240
    %vm242 = vweird.f32 %v216
    %vm243 = vweird.f32 %v237
    %vm244 = vmor %vm242, %vm243
    %v245 = vsel %vm244, %v237, %v241
    %v246 = vand.u32 2147483647, %v216
    %vm247 = vcmp.eq.f32.partialorder %v246, 8.507059e+37
    %v248 = vand.u32 %v216, 2147483648
    %v249 = vor.u32 1.1754944e-38, %v248
    %v250 = vsel %vm247, %v249, %v245
    %v251 = vrcp.pop %v219
    %v252 = vmul.f32 %v219, %v251
    %v253 = vsub.f32 1.0, %v252
    %v254 = vmul.f32 %v251, %v253
    %v255 = vadd.f32 %v251, %v254
    %vm256 = vweird.f32 %v219
    %vm257 = vweird.f32 %v251
    %vm258 = vmor %vm256, %vm257
    %v259 = vsel %vm258, %v251, %v255
    %v260 = vand.u32 2147483647, %v219
    %vm261 = vcmp.eq.f32.partialorder %v260, 8.507059e+37
    %v262 = vand.u32 %v219, 2147483648
    %v263 = vor.u32 1.1754944e-38, %v262
    %v264 = vsel %vm261, %v263, %v259
    %v265 = vrcp.pop %v222
    %v266 = vmul.f32 %v222, %v265
    %v267 = vsub.f32 1.0, %v266
    %v268 = vmul.f32 %v265, %v267
    %v269 = vadd.f32 %v265, %v268
    %vm270 = vweird.f32 %v222
    %vm271 = vweird.f32 %v265
    %vm272 = vmor %vm270, %vm271
    %v273 = vsel %vm272, %v265, %v269
    %v274 = vand.u32 2147483647, %v222
    %vm275 = vcmp.eq.f32.partialorder %v274, 8.507059e+37
    %v276 = vand.u32 %v222, 2147483648
    %v277 = vor.u32 1.1754944e-38, %v276
    %v278 = vsel %vm275, %v277, %v273
    %v279 = vmul.f32 %v204, %v236
    %v280 = vmul.f32 %v206, %v250
    %v281 = vmul.f32 %v208, %v264
    %v282 = vmul.f32 %v210, %v278
    %283 = vst.msk [vmem:[#allocation9] sm:$0xff] %vm186, %v279
    %284 = vst.msk [vmem:[#allocation9 + $0x8] sm:$0xff] %vm186, %v280
    %285 = vst.msk [vmem:[#allocation9 + $0x10] sm:$0xff] %vm186, %v281
    %286 = vst.msk [vmem:[#allocation9 + $0x18] sm:$0xff] %vm186, %v282
    %v288 = vsel %vm186, %v279, 0
    %290 = vmatpush.msra.mxu0 0.0
    %291 = vmatpush.msra.mxu0 0.0
    %292 = vmatpush.msra.mxu0 0.0
    %293 = vmatpush.msra.mxu0 0.0
    %294 = vmatpush.msra.mxu0 0.0
    %295 = vmatpush.msra.mxu0 0.0
    %296 = vmatpush.msra.mxu0 0.0
    %297 = vmatpush.msra.mxu0 0.0
    %298 = vmatpush.msra.mxu0 0.0
    %299 = vmatpush.msra.mxu0 0.0
    %300 = vmatpush.msra.mxu0 0.0
    %301 = vmatpush.msra.mxu0 0.0
    %302 = vmatpush.msra.mxu0 0.0
    %303 = vmatpush.msra.mxu0 0.0
    %304 = vmatpush.msra.mxu0 0.0
    %305 = vmatpush.msra.mxu0 %v73
    %306 = vmatmul.f32.gmra.mxu0 %v288
    %v307 = vpop.f32.mrf.mxu0
    %v308 = vadd.f32 0.0, %v307
    %309 = vdwg.mxu0
    %v311 = vsel %vm186, %v280, 0
    %313 = vmatpush.msra.mxu0 0.0
    %314 = vmatpush.msra.mxu0 0.0
    %315 = vmatpush.msra.mxu0 0.0
    %316 = vmatpush.msra.mxu0 0.0
    %317 = vmatpush.msra.mxu0 0.0
    %318 = vmatpush.msra.mxu0 0.0
    %319 = vmatpush.msra.mxu0 0.0
    %320 = vmatpush.msra.mxu0 0.0
    %321 = vmatpush.msra.mxu0 0.0
    %322 = vmatpush.msra.mxu0 0.0
    %323 = vmatpush.msra.mxu0 0.0
    %324 = vmatpush.msra.mxu0 0.0
    %325 = vmatpush.msra.mxu0 0.0
    %326 = vmatpush.msra.mxu0 0.0
    %327 = vmatpush.msra.mxu0 0.0
    %328 = vmatpush.msra.mxu0 %v74
    %329 = vmatmul.f32.gmra.mxu0 %v311
    %v330 = vpop.f32.mrf.mxu0
    %v331 = vadd.f32 0.0, %v330
    %332 = vdwg.mxu0
    %v334 = vsel %vm186, %v281, 0
    %336 = vmatpush.msra.mxu0 0.0
    %337 = vmatpush.msra.mxu0 0.0
    %338 = vmatpush.msra.mxu0 0.0
    %339 = vmatpush.msra.mxu0 0.0
    %340 = vmatpush.msra.mxu0 0.0
    %341 = vmatpush.msra.mxu0 0.0
    %342 = vmatpush.msra.mxu0 0.0
    %343 = vmatpush.msra.mxu0 0.0
    %344 = vmatpush.msra.mxu0 0.0
    %345 = vmatpush.msra.mxu0 0.0
    %346 = vmatpush.msra.mxu0 0.0
    %347 = vmatpush.msra.mxu0 0.0
    %348 = vmatpush.msra.mxu0 0.0
    %349 = vmatpush.msra.mxu0 0.0
    %350 = vmatpush.msra.mxu0 0.0
    %351 = vmatpush.msra.mxu0 %v75
    %352 = vmatmul.f32.gmra.mxu0 %v334
    %v353 = vpop.f32.mrf.mxu0
    %v354 = vadd.f32 0.0, %v353
    %355 = vdwg.mxu0
    %v357 = vsel %vm186, %v282, 0
    %359 = vmatpush.msra.mxu0 0.0
    %360 = vmatpush.msra.mxu0 0.0
    %361 = vmatpush.msra.mxu0 0.0
    %362 = vmatpush.msra.mxu0 0.0
    %363 = vmatpush.msra.mxu0 0.0
    %364 = vmatpush.msra.mxu0 0.0
    %365 = vmatpush.msra.mxu0 0.0
    %366 = vmatpush.msra.mxu0 0.0
    %367 = vmatpush.msra.mxu0 0.0
    %368 = vmatpush.msra.mxu0 0.0
    %369 = vmatpush.msra.mxu0 0.0
    %370 = vmatpush.msra.mxu0 0.0
    %371 = vmatpush.msra.mxu0 0.0
    %372 = vmatpush.msra.mxu0 0.0
    %373 = vmatpush.msra.mxu0 0.0
    %374 = vmatpush.msra.mxu0 %v76
    %375 = vmatmul.f32.gmra.mxu0 %v357
    %v376 = vpop.f32.mrf.mxu0
    %v377 = vadd.f32 0.0, %v376
    %378 = vdwg.mxu0
    %379 = vst.msk [vmem:[#allocation8] sm:$0xff] %vm81, %v308
    %380 = vst.msk [vmem:[#allocation8 + $0x8] sm:$0xff] %vm81, %v331
    %381 = vst.msk [vmem:[#allocation8 + $0x10] sm:$0xff] %vm81, %v354
    %382 = vst.msk [vmem:[#allocation8 + $0x18] sm:$0xff] %vm81, %v377
    // Predicated region
    $region26: #{_sdpa_nomask.1} parent=1 // pred_check
      _
    $region27: #{_sdpa_nomask.1} parent=1 // pred_check_branch
      %384 = sbr.rel (0) target = $region29
    $region28: #{_sdpa_nomask.1} parent=1 // pred_region
      %386 = vsyncadd [#allocation4], 0
      %s387 = sshll.u32 [#allocation8], 4
      %s388 = int_to_ptr.vmem [resolvable:$true] %s387
      %s389 = sshll.u32 %s3, 4
      %s390 = int_to_ptr.hbm [resolvable:$true] %s389
      %395 = dma.vmem_to_hbm [thread:$0]  %s388, 512, %s390, [#allocation4], 128, 128, 8
    $region29: #{_sdpa_nomask.1} parent=1 // pred_fallthru
      _
    // Predicated region
    $region30: #{_sdpa_nomask.1} parent=1 // pred_check
      _
    $region31: #{_sdpa_nomask.1} parent=1 // pred_check_branch
      %397 = sbr.rel (0) target = $region33
    $region32: #{_sdpa_nomask.1} parent=1 // pred_region
      %399 = vsyncadd [#allocation10], 0
      %s400 = sshll.u32 [#allocation9], 4
      %s401 = int_to_ptr.vmem [resolvable:$true] %s400
      %s402 = sshll.u32 %s4, 4
      %s403 = int_to_ptr.hbm [resolvable:$true] %s402
      %408 = dma.vmem_to_hbm [thread:$0]  %s401, 512, %s403, [#allocation10], 128, 128, 8
    $region33: #{_sdpa_nomask.1} parent=1 // pred_fallthru
      _
    // Predicated region
    $region34: #{_sdpa_nomask.1} parent=1 // pred_check
      _
    $region35: #{_sdpa_nomask.1} parent=1 // pred_check_branch
      %410 = sbr.rel (0) target = $region37
    $region36: #{_sdpa_nomask.1} parent=1 // pred_region
      %412 = dma.done [#allocation4], 512
    $region37: #{_sdpa_nomask.1} parent=1 // pred_fallthru
      _
    // Predicated region
    $region38: #{_sdpa_nomask.1} parent=1 // pred_check
      _
    $region39: #{_sdpa_nomask.1} parent=1 // pred_check_branch
      %414 = sbr.rel (0) target = $region41
    $region40: #{_sdpa_nomask.1} parent=1 // pred_region
      %416 = dma.done [#allocation10], 512
    $region41: #{_sdpa_nomask.1} parent=1 // pred_fallthru
      _
    %417 = vsyncpa [#allocation3], 1
    %418 = vsyncpa [#allocation6], 1
    %419 = vsyncpa [#allocation4], 1
    %420 = vsyncpa [#allocation10], 1

</llo_original>
